<compile_context>
chip_gen: v6e
topology: v6e:2x2x1
jax: 0.10.0
libtpu: 0.0.40
codegen_flags: <defaults>
</compile_context>

<pallas_src>
import functools
from typing import NamedTuple

import jax
import jax.numpy as jnp
from jax.experimental import pallas as pl
from jax.experimental.pallas import tpu as pltpu


def _round_up(v, m):
    return (v + m - 1) // m * m


class RNNCellConfig(NamedTuple):
    batch_size: int
    input_size: int
    hidden_size: int
    tm: int
    tn: int
    tk: int
    m_pad: int
    n_pad: int
    kx_pad: int
    kh_pad: int
    kx_tiles: int
    kh_tiles: int


def make_rnncell_config(input_size, hidden_size, batch_size):
    """Single source of truth for padding + tiling (shared by param prep and
    the forward call)."""
    # --- M (batch): minimal padding for awkward batch sizes.
    tm = _round_up(batch_size, 8) if batch_size <= 256 else 256
    m_pad = _round_up(batch_size, tm)

    # --- N (hidden): prefer 256-wide tiles when they add no padding.
    n128 = _round_up(hidden_size, 128)
    tn = 256 if (n128 % 256 == 0) else 128
    # Keep >= 2 N tiles when there is only one M tile (v7x dual-TC utilization).
    if tn == 256 and (n128 // 256) == 1 and (m_pad // tm) == 1 and (n128 // 128) >= 2:
        tn = 128
    n_pad = _round_up(hidden_size, tn)

    # --- K: uniform tile across the x-segment and the h-segment of the fused W.
    kx128 = _round_up(input_size, 128)
    kh128 = _round_up(hidden_size, 128)
    tk = 256 if (kx128 % 256 == 0 and kh128 % 256 == 0) else 128
    kx_pad = _round_up(input_size, tk)
    kh_pad = _round_up(hidden_size, tk)

    return RNNCellConfig(
        batch_size=batch_size, input_size=input_size, hidden_size=hidden_size,
        tm=tm, tn=tn, tk=tk, m_pad=m_pad, n_pad=n_pad,
        kx_pad=kx_pad, kh_pad=kh_pad,
        kx_tiles=kx_pad // tk, kh_tiles=kh_pad // tk,
    )


def prepare_rnncell_params(w_ih, w_hh, b_ih, b_hh, cfg, param_dtype=jnp.bfloat16):
    """One-time parameter prep (transpose / pad / dtype cast happen here, NOT in
    the per-timestep hot path).  Keep the returned arrays persistent."""
    hidden, in_sz = w_ih.shape
    assert in_sz == cfg.input_size and hidden == cfg.hidden_size

    w_x = (jnp.zeros((cfg.kx_pad, cfg.n_pad), param_dtype)
           .at[:in_sz, :hidden].set(w_ih.T.astype(param_dtype)))
    w_h = (jnp.zeros((cfg.kh_pad, cfg.n_pad), param_dtype)
           .at[:hidden, :hidden].set(w_hh.T.astype(param_dtype)))
    # Fused weight: K rows = [x-segment (kx_pad) ; h-segment (kh_pad)].
    w_pad = jnp.concatenate([w_x, w_h], axis=0)

    # Combined bias, kept in f32 for the epilogue.
    b = (b_ih + b_hh).astype(jnp.float32).reshape(1, hidden)
    b_pad = jnp.zeros((1, cfg.n_pad), jnp.float32).at[:, :hidden].set(b)
    return w_pad, b_pad


def _matmul_accum(a_ref, w_ref, acc_ref):
    a = a_ref[...]
    w = w_ref[...]
    if a.dtype != w.dtype:           # bf16 weights: cast lhs tile once (VPU)
        a = a.astype(w.dtype)
    acc_ref[...] += jnp.dot(a, w, preferred_element_type=jnp.float32)


def _rnncell_kernel(x_ref, h_ref, w_ref, b_ref, o_ref, acc_ref, *, kx_tiles):
    """One (tm, tn) output tile; grid axis 2 is the split K reduction
    (first kx_tiles steps consume x, remaining steps consume h)."""
    k = pl.program_id(2)

    @pl.when(k == 0)
    def _():
        acc_ref[...] = jnp.zeros_like(acc_ref)

    @pl.when(k < kx_tiles)
    def _():
        _matmul_accum(x_ref, w_ref, acc_ref)

    @pl.when(k >= kx_tiles)
    def _():
        _matmul_accum(h_ref, w_ref, acc_ref)

    @pl.when(k == pl.num_programs(2) - 1)
    def _():
        # Epilogue: combined bias + tanh in f32, single cast on store.
        o_ref[...] = jnp.tanh(acc_ref[...] + b_ref[...]).astype(o_ref.dtype)


def _pad_to(a, rows, cols):
    r, c = a.shape
    if r == rows and c == cols:       # aligned shapes -> no XLA op emitted
        return a
    return jnp.pad(a, ((0, rows - r), (0, cols - c)))


@functools.partial(jax.jit, static_argnames=("cfg",))
def rnncell_forward(x, h, w_pad, b_pad, cfg):
    """x: (B, input_size), h: (B, hidden_size); w_pad/b_pad from
    prepare_rnncell_params(cfg).  Returns h': (B, hidden_size)."""
    batch = x.shape[0]
    xp = _pad_to(x, cfg.m_pad, cfg.kx_pad)
    hp = _pad_to(h, cfg.m_pad, cfg.kh_pad)

    kx = cfg.kx_tiles
    grid = (cfg.m_pad // cfg.tm, cfg.n_pad // cfg.tn, cfg.kx_tiles + cfg.kh_tiles)

    out = pl.pallas_call(
        functools.partial(_rnncell_kernel, kx_tiles=kx),
        out_shape=jax.ShapeDtypeStruct((cfg.m_pad, cfg.n_pad), x.dtype),
        grid_spec=pltpu.PrefetchScalarGridSpec(
            num_scalar_prefetch=0,
            grid=grid,
            in_specs=[
                # x tile: only advances during the x-segment of K (clamped
                # afterwards -> no re-fetch during the h-segment).
                pl.BlockSpec((cfg.tm, cfg.tk),
                             lambda i, j, kk: (i, jnp.minimum(kk, kx - 1))),
                # h tile: held at 0 during the x-segment, then advances.
                pl.BlockSpec((cfg.tm, cfg.tk),
                             lambda i, j, kk: (i, jnp.maximum(kk - kx, 0))),
                # fused weight tile (bf16): K rows are [x-seg ; h-seg].
                pl.BlockSpec((cfg.tk, cfg.tn), lambda i, j, kk: (kk, j)),
                # combined bias tile (f32).
                pl.BlockSpec((1, cfg.tn), lambda i, j, kk: (0, j)),
            ],
            out_specs=pl.BlockSpec((cfg.tm, cfg.tn), lambda i, j, kk: (i, j)),
            scratch_shapes=[pltpu.VMEM((cfg.tm, cfg.tn), jnp.float32)],
        ),
        compiler_params=pltpu.CompilerParams(
            dimension_semantics=("parallel", "parallel", "arbitrary"),
        ),
    )(xp, hp, w_pad, b_pad)

    if cfg.m_pad == batch and cfg.n_pad == cfg.hidden_size:
        return out                    # aligned shapes -> no slice op
    return out[:batch, :cfg.hidden_size]


def _reference(x, h, w_ih, w_hh, b_ih, b_hh):
    return jnp.tanh(x @ w_ih.T + b_ih + h @ w_hh.T + b_hh)


def _reference_cast(x, h, w_ih, w_hh, b_ih, b_hh, dtype):
    """Reference matching the kernel's bf16-weight / bf16-lhs, f32-accumulate path."""
    f32 = jnp.float32
    xc, hc = x.astype(dtype).astype(f32), h.astype(dtype).astype(f32)
    wic, whc = w_ih.astype(dtype).astype(f32), w_hh.astype(dtype).astype(f32)
    return jnp.tanh(xc @ wic.T + b_ih + hc @ whc.T + b_hh)


if __name__ == "__main__":
    # --- Module-sized test (batch=1, input=4, hidden=4), matching the PyTorch spec.
    batch_size, input_size, hidden_size = 1, 4, 4

    key = jax.random.PRNGKey(0)
    k_x, k_wih, k_whh, k_bih, k_bhh = jax.random.split(key, 5)

    bound = hidden_size ** -0.5  # torch.nn.RNNCell init: U(-1/sqrt(H), 1/sqrt(H))
    w_ih = jax.random.uniform(k_wih, (hidden_size, input_size), jnp.float32, -bound, bound)
    w_hh = jax.random.uniform(k_whh, (hidden_size, hidden_size), jnp.float32, -bound, bound)
    b_ih = jax.random.uniform(k_bih, (hidden_size,), jnp.float32, -bound, bound)
    b_hh = jax.random.uniform(k_bhh, (hidden_size,), jnp.float32, -bound, bound)

    x = jax.random.normal(k_x, (batch_size, input_size), jnp.float32)
    h0 = jnp.zeros((batch_size, hidden_size), jnp.float32)  # init_hidden()

    cfg = make_rnncell_config(input_size, hidden_size, batch_size)
    # f32 params here for an exact check at module shapes.
    w_pad, b_pad = prepare_rnncell_params(w_ih, w_hh, b_ih, b_hh, cfg,
                                          param_dtype=jnp.float32)
    h1 = rnncell_forward(x, h0, w_pad, b_pad, cfg)
    jax.block_until_ready(h1)

    ref = _reference(x, h0, w_ih, w_hh, b_ih, b_hh)
    assert h1.shape == (batch_size, hidden_size)
    assert jnp.allclose(h1, ref, atol=1e-5, rtol=1e-5), "mismatch vs reference (small)"

    # --- Secondary check: multi-tile grid (M/N/K > 1 tile, split-K transition)
    #     with bf16 weights (the production-default path).
    b2, in2, hid2 = 4, 20, 300
    key2 = jax.random.PRNGKey(0)
    k2x, k2h, k2a, k2b, k2c, k2d = jax.random.split(key2, 6)
    bound2 = hid2 ** -0.5
    w_ih2 = jax.random.uniform(k2a, (hid2, in2), jnp.float32, -bound2, bound2)
    w_hh2 = jax.random.uniform(k2b, (hid2, hid2), jnp.float32, -bound2, bound2)
    b_ih2 = jax.random.uniform(k2c, (hid2,), jnp.float32, -bound2, bound2)
    b_hh2 = jax.random.uniform(k2d, (hid2,), jnp.float32, -bound2, bound2)
    x2 = jax.random.normal(k2x, (b2, in2), jnp.float32)
    h2 = jax.random.normal(k2h, (b2, hid2), jnp.float32)

    cfg2 = make_rnncell_config(in2, hid2, b2)
    w_pad2, b_pad2 = prepare_rnncell_params(w_ih2, w_hh2, b_ih2, b_hh2, cfg2,
                                            param_dtype=jnp.bfloat16)
    out2 = rnncell_forward(x2, h2, w_pad2, b_pad2, cfg2)
    jax.block_until_ready(out2)

    ref2_cast = _reference_cast(x2, h2, w_ih2, w_hh2, b_ih2, b_hh2, jnp.bfloat16)
    ref2_f32 = _reference(x2, h2, w_ih2, w_hh2, b_ih2, b_hh2)
    assert out2.shape == (b2, hid2)
    assert jnp.allclose(out2, ref2_cast, atol=1e-4, rtol=1e-4), "mismatch vs bf16 reference"
    assert jnp.allclose(out2, ref2_f32, atol=3e-2, rtol=3e-2), "bf16 drift vs f32 reference"

    print("KERNEL_OK")
</pallas_src>

<mosaic_0001>
module attributes {stable_mosaic.version = 11 : i64} {
  func.func @_rnncell_kernel(%arg0: i32, %arg1: i32, %arg2: i32, %arg3: memref<8x128xf32, #tpu.memory_space<vmem>>, %arg4: memref<8x128xf32, #tpu.memory_space<vmem>>, %arg5: memref<128x128xf32, #tpu.memory_space<vmem>>, %arg6: memref<1x128xf32, #tpu.memory_space<vmem>>, %arg7: memref<8x128xf32, #tpu.memory_space<vmem>>, %arg8: memref<8x128xf32, #tpu.memory_space<vmem>>) attributes {dimension_semantics = [#tpu.dimension_semantics<parallel>, #tpu.dimension_semantics<parallel>, #tpu.dimension_semantics<arbitrary>], iteration_bounds = array<i64: 1, 1, 2>, scalar_prefetch = 0 : i64, scratch_operands = 1 : i64, tpu.core_type = #tpu.core_type<tc>, window_params = [{transform_indices = @transform_0, window_bounds = array<i64: 8, 128>}, {transform_indices = @transform_1, window_bounds = array<i64: 8, 128>}, {transform_indices = @transform_2, window_bounds = array<i64: 128, 128>}, {transform_indices = @transform_3, window_bounds = array<i64: 1, 128>}, {transform_indices = @transform_4, window_bounds = array<i64: 8, 128>}]} {
    %c0_i32 = arith.constant 0 : i32
    %0 = arith.cmpi eq, %arg2, %c0_i32 : i32
    %1 = arith.extui %0 : i1 to i32
    %c0_i32_0 = arith.constant 0 : i32
    %2 = arith.cmpi ne, %1, %c0_i32_0 : i32
    scf.if %2 {
      %cst = arith.constant 0.000000e+00 : f32
      %12 = vector.broadcast %cst : f32 to vector<8x128xf32>
      %c0 = arith.constant 0 : index
      %c0_6 = arith.constant 0 : index
      %13 = vector.load %arg8[%c0, %c0_6] : memref<8x128xf32, #tpu.memory_space<vmem>>, vector<8x128xf32>
      tpu.vector_store %arg8[%c0, %c0_6], %12 {strides = array<i32>} : memref<8x128xf32, #tpu.memory_space<vmem>>, vector<8x128xf32>,
    } else {
    }
    %c1_i32 = arith.constant 1 : i32
    %3 = arith.cmpi slt, %arg2, %c1_i32 : i32
    %4 = arith.extui %3 : i1 to i32
    %c0_i32_1 = arith.constant 0 : i32
    %5 = arith.cmpi ne, %4, %c0_i32_1 : i32
    scf.if %5 {
      %c0 = arith.constant 0 : index
      %c0_6 = arith.constant 0 : index
      %12 = vector.load %arg3[%c0, %c0_6] : memref<8x128xf32, #tpu.memory_space<vmem>>, vector<8x128xf32>
      %c0_7 = arith.constant 0 : index
      %c0_8 = arith.constant 0 : index
      %13 = vector.load %arg5[%c0_7, %c0_8] : memref<128x128xf32, #tpu.memory_space<vmem>>, vector<128x128xf32>
      %c0_9 = arith.constant 0 : index
      %c0_10 = arith.constant 0 : index
      %14 = vector.load %arg8[%c0_9, %c0_10] : memref<8x128xf32, #tpu.memory_space<vmem>>, vector<8x128xf32>
      %cst = arith.constant dense<0.000000e+00> : vector<8x128xf32>
      %15 = tpu.matmul %12, %13, %cst {dimension_numbers = #tpu.dot_dimension_numbers<[1], [0], [0], [1], [0, 0, 1, 1], [], []>} : vector<8x128xf32>, vector<128x128xf32>, vector<8x128xf32> -> vector<8x128xf32>
      %16 = arith.addf %14, %15 : vector<8x128xf32>
      %c0_11 = arith.constant 0 : index
      %c0_12 = arith.constant 0 : index
      %17 = vector.load %arg8[%c0_11, %c0_12] : memref<8x128xf32, #tpu.memory_space<vmem>>, vector<8x128xf32>
      tpu.vector_store %arg8[%c0_11, %c0_12], %16 {strides = array<i32>} : memref<8x128xf32, #tpu.memory_space<vmem>>, vector<8x128xf32>,
    } else {
    }
    %c1_i32_2 = arith.constant 1 : i32
    %6 = arith.cmpi sge, %arg2, %c1_i32_2 : i32
    %7 = arith.extui %6 : i1 to i32
    %c0_i32_3 = arith.constant 0 : i32
    %8 = arith.cmpi ne, %7, %c0_i32_3 : i32
    scf.if %8 {
      %c0 = arith.constant 0 : index
      %c0_6 = arith.constant 0 : index
      %12 = vector.load %arg4[%c0, %c0_6] : memref<8x128xf32, #tpu.memory_space<vmem>>, vector<8x128xf32>
      %c0_7 = arith.constant 0 : index
      %c0_8 = arith.constant 0 : index
      %13 = vector.load %arg5[%c0_7, %c0_8] : memref<128x128xf32, #tpu.memory_space<vmem>>, vector<128x128xf32>
      %c0_9 = arith.constant 0 : index
      %c0_10 = arith.constant 0 : index
      %14 = vector.load %arg8[%c0_9, %c0_10] : memref<8x128xf32, #tpu.memory_space<vmem>>, vector<8x128xf32>
      %cst = arith.constant dense<0.000000e+00> : vector<8x128xf32>
      %15 = tpu.matmul %12, %13, %cst {dimension_numbers = #tpu.dot_dimension_numbers<[1], [0], [0], [1], [0, 0, 1, 1], [], []>} : vector<8x128xf32>, vector<128x128xf32>, vector<8x128xf32> -> vector<8x128xf32>
      %16 = arith.addf %14, %15 : vector<8x128xf32>
      %c0_11 = arith.constant 0 : index
      %c0_12 = arith.constant 0 : index
      %17 = vector.load %arg8[%c0_11, %c0_12] : memref<8x128xf32, #tpu.memory_space<vmem>>, vector<8x128xf32>
      tpu.vector_store %arg8[%c0_11, %c0_12], %16 {strides = array<i32>} : memref<8x128xf32, #tpu.memory_space<vmem>>, vector<8x128xf32>,
    } else {
    }
    %c1_i32_4 = arith.constant 1 : i32
    %9 = arith.cmpi eq, %arg2, %c1_i32_4 : i32
    %10 = arith.extui %9 : i1 to i32
    %c0_i32_5 = arith.constant 0 : i32
    %11 = arith.cmpi ne, %10, %c0_i32_5 : i32
    scf.if %11 {
      %c0 = arith.constant 0 : index
      %c0_6 = arith.constant 0 : index
      %12 = vector.load %arg8[%c0, %c0_6] : memref<8x128xf32, #tpu.memory_space<vmem>>, vector<8x128xf32>
      %c0_7 = arith.constant 0 : index
      %c0_8 = arith.constant 0 : index
      %13 = vector.load %arg6[%c0_7, %c0_8] : memref<1x128xf32, #tpu.memory_space<vmem>>, vector<1x128xf32>
      %14 = vector.broadcast %13 : vector<1x128xf32> to vector<8x128xf32>
      %15 = arith.addf %12, %14 : vector<8x128xf32>
      %16 = math.tanh %15 : vector<8x128xf32>
      %c0_9 = arith.constant 0 : index
      %c0_10 = arith.constant 0 : index
      %17 = vector.load %arg7[%c0_9, %c0_10] : memref<8x128xf32, #tpu.memory_space<vmem>>, vector<8x128xf32>
      tpu.vector_store %arg7[%c0_9, %c0_10], %16 {strides = array<i32>} : memref<8x128xf32, #tpu.memory_space<vmem>>, vector<8x128xf32>,
    } else {
    }
    return
  }
  func.func @transform_0(%arg0: i32, %arg1: i32, %arg2: i32) -> (i32, i32) {
    %c0_i32 = arith.constant 0 : i32
    %0 = arith.minsi %arg2, %c0_i32 : i32
    %c0_i32_0 = arith.constant 0 : i32
    return %arg0, %0 : i32, i32
  }
  func.func @transform_1(%arg0: i32, %arg1: i32, %arg2: i32) -> (i32, i32) {
    %c1_i32 = arith.constant 1 : i32
    %0 = arith.subi %arg2, %c1_i32 : i32
    %c0_i32 = arith.constant 0 : i32
    %1 = arith.maxsi %0, %c0_i32 : i32
    %c0_i32_0 = arith.constant 0 : i32
    return %arg0, %1 : i32, i32
  }
  func.func @transform_2(%arg0: i32, %arg1: i32, %arg2: i32) -> (i32, i32) {
    %c0_i32 = arith.constant 0 : i32
    return %arg2, %arg1 : i32, i32
  }
  func.func @transform_3(%arg0: i32, %arg1: i32, %arg2: i32) -> (i32, i32) {
    %c0_i32 = arith.constant 0 : i32
    %c0_i32_0 = arith.constant 0 : i32
    return %c0_i32, %arg1 : i32, i32
  }
  func.func @transform_4(%arg0: i32, %arg1: i32, %arg2: i32) -> (i32, i32) {
    %c0_i32 = arith.constant 0 : i32
    return %arg0, %arg1 : i32, i32
  }
}

</mosaic_0001>

<llo_original>
// kernel: rnncell_forward.1
$region0: #{rnncell_forward.1}
  #allocation0 [shape = 'u32[]', space=smem, size = 0x4, offset = 0x4, fixed_abs, tag = 'smem constant byte address 0x4 - core index']
  #allocation1 [shape = 'u32[144,128]{1,0:T(1,128)}', space=vmem, size = 0x12000, scoped, tag = 'internal scratch']
  #allocation2 [shape = 'f32[8,128]{1,0:T(8,128)}', space=vmem, size = 0x1000, scoped, tag = 'scratch operand']
  %s0 = inlined_call_operand.vmem [shape: f32[8,128], index: 0, kind: input, shape index: {}]
  %s1 = inlined_call_operand.vmem [shape: f32[8,128], index: 1, kind: input, shape index: {}]
  %s2 = inlined_call_operand.hbm [shape: f32[256,128], index: 2, kind: input, shape index: {}]
  %s3 = inlined_call_operand.vmem [shape: f32[1,128], index: 3, kind: input, shape index: {}]
  %s4 = inlined_call_operand.vmem [shape: f32[8,128], index: 4, kind: output, shape index: {}]
  %s5 = sld [smem:[#allocation0]]
  $region69: #{rnncell_forward.1} parent=0
    _
  %s7 = ssub.s32 1, %s5
  %s8 = scalar_select 0, %s7, %s5
  $region1: #{rnncell_forward.1} parent=0
    #allocation3 [shape = 'u8[131072]{0}', space=vmem, size = 0x20000, scoped, tag = 'input window, operand 2']
    #allocation4 [shape = 's32[2]{0}', space=sflag, size = 0x8, scoped, tag = 'scoped memory for rnncell_forward.1']
    %9 = vsyncpa [#allocation4], 0
    %s10 = scalar_lea.sflag [#allocation4], 1
    %11 = vsyncpa %s10, 0
    loop: start=0, step=1, limit=4
    $region2: #{rnncell_forward.1} parent=1 // loop_pre_header
      _
    $region3: #{rnncell_forward.1} parent=1 // loop_header
      %s13 = sphi 0, %s17
      %p14 = scmp.ge.s32.totalorder %s13, 4
      %s20 = sphi 0, %s39
      %s21 = sphi 0, %s35
      %s22 = sphi 0, %s31
      %s23 = sphi 0, %s20
      %s24 = sphi 0, %s21
      %s25 = sphi 0, %s22
      %s26 = sphi 0, %s23
      %s27 = sphi 0, %s24
      %s28 = sphi 0, %s25
      %s48 = sphi 0, %s50
      %s51 = sphi 0, %s48
      %s52 = sphi 0, %s51
      %s68 = sphi 0, %s52
      %s82 = sphi 0, %s84
      %s85 = sphi 0, %s82
      %s86 = sphi 0, %s85
      %s102 = sphi 0, %s86
      %s110 = sphi 0, %s112
      %s113 = sphi 0, %s110
      %s114 = sphi 0, %s113
      %s130 = sphi 0, %s114
      %s136 = sphi 0, %s138
      %s139 = sphi 0, %s136
      %s140 = sphi 0, %s139
      %s156 = sphi 0, %s140
      %s164 = sphi 0, %s166
      %s167 = sphi 0, %s164
      %s168 = sphi 0, %s167
      %s184 = sphi 0, %s168
    $region4: #{rnncell_forward.1} parent=1 // loop_header_branch
      %16 = sbr.rel (%p14) target = $region8
    $region5: #{rnncell_forward.1} parent=1 // loop_body
      %s18 = ssub.s32 %s13, 1
      %s19 = ssub.s32 %s13, 2
      %s29 = sadd.s32 1, %s22
      %p30 = scmp.ge.s32.totalorder %s29, 2
      %s31 = scalar_select %p30, 0, %s29
      %s32 = sadd.s32 1, %s21
      %s33 = scalar_select %p30, %s32, %s21
      %p34 = scmp.ge.s32.totalorder %s33, 1
      %s35 = scalar_select %p34, 0, %s33
      %s36 = sadd.s32 1, %s20
      %s37 = scalar_select %p34, %s36, %s20
      %p38 = scmp.ge.s32.totalorder %s37, 1
      %s39 = scalar_select %p38, 0, %s37
      %p40 = scmp.lt.s32.totalorder %s22, 0
      %s41 = scalar_select %p40, %s22, 0
      %p42 = scmp.lt.s32.totalorder %s31, 0
      %s43 = scalar_select %p42, %s31, 0
      %s44 = ssub.s32 %s20, %s39
      %s45 = ssub.s32 %s41, %s43
      %s46 = sor.u32 %s44, %s45
      %p47 = scmp.eq.s32.totalorder %s46, 0
      %s49 = sadd.s32 %s48, 1
      %s50 = scalar_select %p47, %s48, %s49
      %p53 = pneg %p47
      %p54 = scmp.eq.s32.totalorder %s13, 1
      %p55 = por %p53, %p54
      %p56 = scmp.ne.s32.totalorder %s48, %s51
      %p57 = scmp.eq.s32.totalorder %s13, 0
      %p58 = por %p56, %p57
      %p59 = scmp.ne.s32.totalorder %s48, %s51
      %p60 = scmp.eq.s32.totalorder %s18, 1
      %p61 = por %p59, %p60
      %p62 = scmp.ne.s32.totalorder %s51, %s52
      %p63 = scmp.eq.s32.totalorder %s18, 0
      %p64 = por %p62, %p63
      %p65 = scmp.ne.s32.totalorder %s51, %s52
      %p66 = scmp.eq.s32.totalorder %s19, 1
      %p67 = por %p65, %p66
      %p69 = scmp.ne.s32.totalorder %s52, %s68
      %p70 = scmp.eq.s32.totalorder %s19, 0
      %p71 = por %p69, %p70
      %s72 = ssub.s32 %s22, 1
      %p73 = scmp.gt.s32.totalorder %s72, 0
      %s74 = scalar_select %p73, %s72, 0
      %s75 = ssub.s32 %s31, 1
      %p76 = scmp.gt.s32.totalorder %s75, 0
      %s77 = scalar_select %p76, %s75, 0
      %s78 = ssub.s32 %s20, %s39
      %s79 = ssub.s32 %s74, %s77
      %s80 = sor.u32 %s78, %s79
      %p81 = scmp.eq.s32.totalorder %s80, 0
      %s83 = sadd.s32 %s82, 1
      %s84 = scalar_select %p81, %s82, %s83
      %p87 = pneg %p81
      %p88 = scmp.eq.s32.totalorder %s13, 1
      %p89 = por %p87, %p88
      %p90 = scmp.ne.s32.totalorder %s82, %s85
      %p91 = scmp.eq.s32.totalorder %s13, 0
      %p92 = por %p90, %p91
      %p93 = scmp.ne.s32.totalorder %s82, %s85
      %p94 = scmp.eq.s32.totalorder %s18, 1
      %p95 = por %p93, %p94
      %p96 = scmp.ne.s32.totalorder %s85, %s86
      %p97 = scmp.eq.s32.totalorder %s18, 0
      %p98 = por %p96, %p97
      %p99 = scmp.ne.s32.totalorder %s85, %s86
      %p100 = scmp.eq.s32.totalorder %s19, 1
      %p101 = por %p99, %p100
      %p103 = scmp.ne.s32.totalorder %s86, %s102
      %p104 = scmp.eq.s32.totalorder %s19, 0
      %p105 = por %p103, %p104
      %s106 = ssub.s32 %s22, %s31
      %s107 = ssub.s32 %s21, %s35
      %s108 = sor.u32 %s106, %s107
      %p109 = scmp.eq.s32.totalorder %s108, 0
      %s111 = sadd.s32 %s110, 1
      %s112 = scalar_select %p109, %s110, %s111
      %p115 = pneg %p109
      %p116 = scmp.eq.s32.totalorder %s13, 1
      %p117 = por %p115, %p116
      %p118 = scmp.ne.s32.totalorder %s110, %s113
      %p119 = scmp.eq.s32.totalorder %s13, 0
      %p120 = por %p118, %p119
      %p121 = scmp.ne.s32.totalorder %s110, %s113
      %p122 = scmp.eq.s32.totalorder %s18, 1
      %p123 = por %p121, %p122
      %p124 = scmp.ne.s32.totalorder %s113, %s114
      %p125 = scmp.eq.s32.totalorder %s18, 0
      %p126 = por %p124, %p125
      %p127 = scmp.ne.s32.totalorder %s113, %s114
      %p128 = scmp.eq.s32.totalorder %s19, 1
      %p129 = por %p127, %p128
      %p131 = scmp.ne.s32.totalorder %s114, %s130
      %p132 = scmp.eq.s32.totalorder %s19, 0
      %p133 = por %p131, %p132
      %s134 = ssub.s32 %s21, %s35
      %p135 = scmp.eq.s32.totalorder %s134, 0
      %s137 = sadd.s32 %s136, 1
      %s138 = scalar_select %p135, %s136, %s137
      %p141 = pneg %p135
      %p142 = scmp.eq.s32.totalorder %s13, 1
      %p143 = por %p141, %p142
      %p144 = scmp.ne.s32.totalorder %s136, %s139
      %p145 = scmp.eq.s32.totalorder %s13, 0
      %p146 = por %p144, %p145
      %p147 = scmp.ne.s32.totalorder %s136, %s139
      %p148 = scmp.eq.s32.totalorder %s18, 1
      %p149 = por %p147, %p148
      %p150 = scmp.ne.s32.totalorder %s139, %s140
      %p151 = scmp.eq.s32.totalorder %s18, 0
      %p152 = por %p150, %p151
      %p153 = scmp.ne.s32.totalorder %s139, %s140
      %p154 = scmp.eq.s32.totalorder %s19, 1
      %p155 = por %p153, %p154
      %p157 = scmp.ne.s32.totalorder %s140, %s156
      %p158 = scmp.eq.s32.totalorder %s19, 0
      %p159 = por %p157, %p158
      %s160 = ssub.s32 %s20, %s39
      %s161 = ssub.s32 %s21, %s35
      %s162 = sor.u32 %s160, %s161
      %p163 = scmp.eq.s32.totalorder %s162, 0
      %s165 = sadd.s32 %s164, 1
      %s166 = scalar_select %p163, %s164, %s165
      %p169 = pneg %p163
      %p170 = scmp.eq.s32.totalorder %s13, 1
      %p171 = por %p169, %p170
      %p172 = scmp.ne.s32.totalorder %s164, %s167
      %p173 = scmp.eq.s32.totalorder %s13, 0
      %p174 = por %p172, %p173
      %p175 = scmp.ne.s32.totalorder %s164, %s167
      %p176 = scmp.eq.s32.totalorder %s18, 1
      %p177 = por %p175, %p176
      %p178 = scmp.ne.s32.totalorder %s167, %s168
      %p179 = scmp.eq.s32.totalorder %s18, 0
      %p180 = por %p178, %p179
      %p181 = scmp.ne.s32.totalorder %s167, %s168
      %p182 = scmp.eq.s32.totalorder %s19, 1
      %p183 = por %p181, %p182
      %p185 = scmp.ne.s32.totalorder %s168, %s184
      %p186 = scmp.eq.s32.totalorder %s19, 0
      %p187 = por %p185, %p186
      %p188 = scmp.le.s32.totalorder 1, %s13
      %p189 = scmp.lt.s32.totalorder %s13, 3
      %p190 = pnand %p188, %p189
      %p191 = pneg %p190
      // Predicated region
      $region9: #{rnncell_forward.1} parent=5 // pred_check
        _
      $region10: #{rnncell_forward.1} parent=5 // pred_check_branch
        %193 = sbr.rel (%p190) target = $region12
      $region11: #{rnncell_forward.1} parent=5 // pred_region
        %s194 = ssub.s32 %s13, 1
        // Predicated region
        $region13: #{rnncell_forward.1} parent=11 // pred_check
          %p195 = pneg %p152
        $region14: #{rnncell_forward.1} parent=11 // pred_check_branch
          %197 = sbr.rel (%p195) target = $region16
        $region15: #{rnncell_forward.1} parent=11 // pred_region
          %p198 = scmp.lt.s32.totalorder %s24, 0
          %s199 = scalar_select %p198, %s24, 0
          %s200 = scalar_lea.vmem %s3, %s199
        $region16: #{rnncell_forward.1} parent=11 // pred_fallthru
          _
      $region12: #{rnncell_forward.1} parent=5 // pred_fallthru
        _
      %p201 = scmp.lt.s32.totalorder %s13, 2
      // Predicated region
      $region17: #{rnncell_forward.1} parent=5 // pred_check
        %p202 = pneg %p201
      $region18: #{rnncell_forward.1} parent=5 // pred_check_branch
        %204 = sbr.rel (%p202) target = $region20
      $region19: #{rnncell_forward.1} parent=5 // pred_region
        // Predicated region
        $region21: #{rnncell_forward.1} parent=19 // pred_check
          %p205 = pneg %p58
        $region22: #{rnncell_forward.1} parent=19 // pred_check_branch
          %207 = sbr.rel (%p205) target = $region24
        $region23: #{rnncell_forward.1} parent=19 // pred_region
          %p208 = scmp.lt.s32.totalorder %s22, 0
          %s209 = scalar_select %p208, %s22, 0
          %p210 = scmp.lt.s32.totalorder %s20, 0
          %s211 = scalar_select %p210, %s20, 0
          %p212 = scmp.lt.s32.totalorder %s209, 0
          %s213 = scalar_select %p212, %s209, 0
          %s214 = sadd.s32 %s213, %s211
          %s215 = smul.addr %s214, 8
          %s216 = scalar_lea.vmem %s0, %s215
          %p217 = scmp.lt.s32.totalorder %s22, 0
          %s218 = scalar_select %p217, %s22, 0
        $region24: #{rnncell_forward.1} parent=19 // pred_fallthru
          _
        // Predicated region
        $region25: #{rnncell_forward.1} parent=19 // pred_check
          %p219 = pneg %p92
        $region26: #{rnncell_forward.1} parent=19 // pred_check_branch
          %221 = sbr.rel (%p219) target = $region28
        $region27: #{rnncell_forward.1} parent=19 // pred_region
          %s222 = ssub.s32 %s22, 1
          %p223 = scmp.gt.s32.totalorder %s222, 0
          %s224 = scalar_select %p223, %s222, 0
          %p225 = scmp.lt.s32.totalorder %s20, 0
          %s226 = scalar_select %p225, %s20, 0
          %p227 = scmp.lt.s32.totalorder %s224, 0
          %s228 = scalar_select %p227, %s224, 0
          %s229 = sadd.s32 %s228, %s226
          %s230 = smul.addr %s229, 8
          %s231 = scalar_lea.vmem %s1, %s230
          %s232 = ssub.s32 %s22, 1
          %p233 = scmp.gt.s32.totalorder %s232, 0
          %s234 = scalar_select %p233, %s232, 0
        $region28: #{rnncell_forward.1} parent=19 // pred_fallthru
          _
        // Predicated region
        $region29: #{rnncell_forward.1} parent=19 // pred_check
          %p235 = pneg %p120
        $region30: #{rnncell_forward.1} parent=19 // pred_check_branch
          %237 = sbr.rel (%p235) target = $region32
        $region31: #{rnncell_forward.1} parent=19 // pred_region
          %s238 = sand.u32 %s110, 1
          %s239 = scalar_lea.sflag [#allocation4], %s238
          %s240 = sand.u32 %s110, 1
          %s241 = smul.addr %s240, 128
          %s242 = scalar_lea.vmem [#allocation3], %s241
          %s243 = smul.u32 16, %s22
          %s245 = ssub.s32 2048, 2048
          %246 = vsyncadd %s239, %s245
          %s247 = sadd.s32 %s21, %s243
          %s248 = smul.addr %s247, 128
          %s249 = scalar_lea.hbm %s2, %s248
          %s250 = sshll.u32 %s242, 4
          %s251 = int_to_ptr.vmem [resolvable:$true] %s250
          %256 = dma.hbm_to_vmem [thread:$0]  %s249, 2048, %s251, %s239, 128, 128, 8
        $region32: #{rnncell_forward.1} parent=19 // pred_fallthru
          _
      $region20: #{rnncell_forward.1} parent=5 // pred_fallthru
        _
      %p257 = scmp.le.s32.totalorder 1, %s13
      %p258 = scmp.lt.s32.totalorder %s13, 3
      %p259 = pnand %p257, %p258
      %p260 = pneg %p259
      // Predicated region
      $region33: #{rnncell_forward.1} parent=5 // pred_check
        _
      $region34: #{rnncell_forward.1} parent=5 // pred_check_branch
        %262 = sbr.rel (%p259) target = $region36
      $region35: #{rnncell_forward.1} parent=5 // pred_region
        %s263 = ssub.s32 %s13, 1
        %s264 = sand.u32 %s113, 1
        %s265 = scalar_lea.sflag [#allocation4], %s264
        %s266 = sand.u32 %s113, 1
        %s267 = smul.addr %s266, 128
        %s268 = scalar_lea.vmem [#allocation3], %s267
        // Predicated region
        $region37: #{rnncell_forward.1} parent=35 // pred_check
          %p269 = pneg %p126
        $region38: #{rnncell_forward.1} parent=35 // pred_check_branch
          %271 = sbr.rel (%p269) target = $region40
        $region39: #{rnncell_forward.1} parent=35 // pred_region
          %272 = dma.done %s265, 2048
        $region40: #{rnncell_forward.1} parent=35 // pred_fallthru
          _
        %p273 = scmp.lt.s32.totalorder %s25, 0
        %s274 = scalar_select %p273, %s25, 0
        %p275 = scmp.lt.s32.totalorder %s23, 0
        %s276 = scalar_select %p275, %s23, 0
        %p277 = scmp.lt.s32.totalorder %s274, 0
        %s278 = scalar_select %p277, %s274, 0
        %s279 = sadd.s32 %s278, %s276
        %s280 = smul.addr %s279, 8
        %s281 = scalar_lea.vmem %s0, %s280
        %p282 = pneg %p64
        %p283 = pneg %p61
        %s284 = ssub.s32 %s25, 1
        %p285 = scmp.gt.s32.totalorder %s284, 0
        %s286 = scalar_select %p285, %s284, 0
        %p287 = scmp.lt.s32.totalorder %s23, 0
        %s288 = scalar_select %p287, %s23, 0
        %p289 = scmp.lt.s32.totalorder %s286, 0
        %s290 = scalar_select %p289, %s286, 0
        %s291 = sadd.s32 %s290, %s288
        %s292 = smul.addr %s291, 8
        %s293 = scalar_lea.vmem %s1, %s292
        %p294 = pneg %p98
        %p295 = pneg %p95
        %s296 = sand.u32 %s113, 1
        %s297 = scalar_lea.sflag [#allocation4], %s296
        %s298 = sand.u32 %s113, 1
        %s299 = smul.addr %s298, 128
        %s300 = scalar_lea.vmem [#allocation3], %s299
        %p301 = pneg %p126
        %p302 = pneg %p123
        %p303 = scmp.lt.s32.totalorder %s24, 0
        %s304 = scalar_select %p303, %s24, 0
        %s305 = scalar_lea.vmem %s3, %s304
        %p306 = pneg %p152
        %p307 = pneg %p149
        %p308 = pneg %p180
        %p309 = pneg %p177
        %p310 = scmp.lt.s32.totalorder %s23, 0
        %s311 = scalar_select %p310, %s23, 0
        %p312 = scmp.lt.s32.totalorder %s24, 0
        %s313 = scalar_select %p312, %s24, 0
        %s314 = sadd.s32 %s313, %s311
        %s315 = smul.addr %s314, 8
        %s316 = scalar_lea.vmem %s4, %s315
        %p317 = scmp.lt.s32.totalorder %s25, 0
        %s318 = scalar_select %p317, %s25, 0
        %p319 = scmp.lt.s32.totalorder %s23, 0
        %s320 = scalar_select %p319, %s23, 0
        %p321 = scmp.lt.s32.totalorder %s318, 0
        %s322 = scalar_select %p321, %s318, 0
        %s323 = sadd.s32 %s322, %s320
        %s324 = smul.addr %s323, 8
        %s325 = scalar_lea.vmem %s0, %s324
        %p326 = scmp.lt.s32.totalorder %s25, 0
        %s327 = scalar_select %p326, %s25, 0
        %s328 = ssub.s32 %s25, 1
        %p329 = scmp.gt.s32.totalorder %s328, 0
        %s330 = scalar_select %p329, %s328, 0
        %p331 = scmp.lt.s32.totalorder %s23, 0
        %s332 = scalar_select %p331, %s23, 0
        %p333 = scmp.lt.s32.totalorder %s330, 0
        %s334 = scalar_select %p333, %s330, 0
        %s335 = sadd.s32 %s334, %s332
        %s336 = smul.addr %s335, 8
        %s337 = scalar_lea.vmem %s1, %s336
        %s338 = ssub.s32 %s25, 1
        %p339 = scmp.gt.s32.totalorder %s338, 0
        %s340 = scalar_select %p339, %s338, 0
        %s341 = smul.u32 16, %s25
        %p342 = scmp.lt.s32.totalorder %s24, 0
        %s343 = scalar_select %p342, %s24, 0
        %s344 = scalar_lea.vmem %s3, %s343
        %p345 = scmp.lt.s32.totalorder %s23, 0
        %s346 = scalar_select %p345, %s23, 0
        %p347 = scmp.lt.s32.totalorder %s24, 0
        %s348 = scalar_select %p347, %s24, 0
        %s349 = sadd.s32 %s348, %s346
        %s350 = smul.addr %s349, 8
        %s351 = scalar_lea.vmem %s4, %s350
        %p352 = scmp.eq.s32.totalorder %s25, 0
        // Predicated region
        $region41: #{rnncell_forward.1} parent=35 // pred_check
          %p353 = pneg %p352
        $region42: #{rnncell_forward.1} parent=35 // pred_check_branch
          %355 = sbr.rel (%p353) target = $region44
        $region43: #{rnncell_forward.1} parent=35 // pred_region
          %356 = vst [vmem:[#allocation2] sm:$0xff] 0.0
        $region44: #{rnncell_forward.1} parent=35 // pred_fallthru
          _
        %p357 = scmp.lt.s32.totalorder %s25, 1
        // Predicated region
        $region45: #{rnncell_forward.1} parent=35 // pred_check
          %p358 = pneg %p357
        $region46: #{rnncell_forward.1} parent=35 // pred_check_branch
          %360 = sbr.rel (%p358) target = $region48
        $region47: #{rnncell_forward.1} parent=35 // pred_region
          %v361 = vld [vmem:[%s325] sm:$0xff]
          %v362 = vld [vmem:[%s268] sm:$0xff]
          %v363 = vld [vmem:[%s268 + $0x8] sm:$0xff]
          %v364 = vld [vmem:[%s268 + $0x10] sm:$0xff]
          %v365 = vld [vmem:[%s268 + $0x18] sm:$0xff]
          %v366 = vld [vmem:[%s268 + $0x20] sm:$0xff]
          %v367 = vld [vmem:[%s268 + $0x28] sm:$0xff]
          %v368 = vld [vmem:[%s268 + $0x30] sm:$0xff]
          %v369 = vld [vmem:[%s268 + $0x38] sm:$0xff]
          %v370 = vld [vmem:[%s268 + $0x40] sm:$0xff]
          %v371 = vld [vmem:[%s268 + $0x48] sm:$0xff]
          %v372 = vld [vmem:[%s268 + $0x50] sm:$0xff]
          %v373 = vld [vmem:[%s268 + $0x58] sm:$0xff]
          %v374 = vld [vmem:[%s268 + $0x60] sm:$0xff]
          %v375 = vld [vmem:[%s268 + $0x68] sm:$0xff]
          %v376 = vld [vmem:[%s268 + $0x70] sm:$0xff]
          %v377 = vld [vmem:[%s268 + $0x78] sm:$0xff]
          %v378 = vld [vmem:[#allocation2] sm:$0xff]
          %379 = vmatprep.subr.mxu0 0.0
          %380 = vmatpush1.msra.mxu0 %v377
          %381 = vmatprep.subr.mxu0 0.0
          %382 = vmatpush1.msra.mxu0 %v376
          %383 = vmatprep.subr.mxu0 0.0
          %384 = vmatpush1.msra.mxu0 %v375
          %385 = vmatprep.subr.mxu0 0.0
          %386 = vmatpush1.msra.mxu0 %v374
          %387 = vmatprep.subr.mxu0 0.0
          %388 = vmatpush1.msra.mxu0 %v373
          %389 = vmatprep.subr.mxu0 0.0
          %390 = vmatpush1.msra.mxu0 %v372
          %391 = vmatprep.subr.mxu0 0.0
          %392 = vmatpush1.msra.mxu0 %v371
          %393 = vmatprep.subr.mxu0 0.0
          %394 = vmatpush1.msra.mxu0 %v370
          %395 = vmatprep.subr.mxu0 0.0
          %396 = vmatpush1.msra.mxu0 %v369
          %397 = vmatprep.subr.mxu0 0.0
          %398 = vmatpush1.msra.mxu0 %v368
          %399 = vmatprep.subr.mxu0 0.0
          %400 = vmatpush1.msra.mxu0 %v367
          %401 = vmatprep.subr.mxu0 0.0
          %402 = vmatpush1.msra.mxu0 %v366
          %403 = vmatprep.subr.mxu0 0.0
          %404 = vmatpush1.msra.mxu0 %v365
          %405 = vmatprep.subr.mxu0 0.0
          %406 = vmatpush1.msra.mxu0 %v364
          %407 = vmatprep.subr.mxu0 0.0
          %408 = vmatpush1.msra.mxu0 %v363
          %409 = vmatprep.subr.mxu0 0.0
          %410 = vmatpush1.msra.mxu0 %v362
          %411 = vmatprep.subr.mxu0 0.0
          %412 = vmatpush2.msra.mxu0 0.0
          %413 = vmatprep.subr.mxu0 0.0
          %414 = vmatpush2.msra.mxu0 0.0
          %415 = vmatprep.subr.mxu0 0.0
          %416 = vmatpush2.msra.mxu0 0.0
          %417 = vmatprep.subr.mxu0 0.0
          %418 = vmatpush2.msra.mxu0 0.0
          %419 = vmatprep.subr.mxu0 0.0
          %420 = vmatpush2.msra.mxu0 0.0
          %421 = vmatprep.subr.mxu0 0.0
          %422 = vmatpush2.msra.mxu0 0.0
          %423 = vmatprep.subr.mxu0 0.0
          %424 = vmatpush2.msra.mxu0 0.0
          %425 = vmatprep.subr.mxu0 0.0
          %426 = vmatpush2.msra.mxu0 0.0
          %427 = vmatprep.subr.mxu0 0.0
          %428 = vmatpush2.msra.mxu0 0.0
          %429 = vmatprep.subr.mxu0 0.0
          %430 = vmatpush2.msra.mxu0 0.0
          %431 = vmatprep.subr.mxu0 0.0
          %432 = vmatpush2.msra.mxu0 0.0
          %433 = vmatprep.subr.mxu0 0.0
          %434 = vmatpush2.msra.mxu0 0.0
          %435 = vmatprep.subr.mxu0 0.0
          %436 = vmatpush2.msra.mxu0 0.0
          %437 = vmatprep.subr.mxu0 0.0
          %438 = vmatpush2.msra.mxu0 0.0
          %439 = vmatprep.subr.mxu0 0.0
          %440 = vmatpush2.msra.mxu0 0.0
          %441 = vmatprep.subr.mxu0 0.0
          %442 = vmatpush2.msra.mxu0 0.0
          %443 = vmatprep.mubr.f32.mxu0 0.0
          %444 = vmatmul.mubr.f32.gmra.mxu0 %v361
          %v445 = vpop.f32.mrf.mxu0
          %v446 = vadd.f32 0.0, %v445
          %v447 = vpop.f32.mrf.mxu0
          %448 = vdwg.mxu0
          %v449 = vadd.f32 %v378, %v446
          %450 = vst [vmem:[#allocation2] sm:$0xff] %v449
        $region48: #{rnncell_forward.1} parent=35 // pred_fallthru
          _
        %p451 = scmp.ge.s32.totalorder %s25, 1
        // Predicated region
        $region49: #{rnncell_forward.1} parent=35 // pred_check
          %p452 = pneg %p451
        $region50: #{rnncell_forward.1} parent=35 // pred_check_branch
          %454 = sbr.rel (%p452) target = $region52
        $region51: #{rnncell_forward.1} parent=35 // pred_region
          %v455 = vld [vmem:[%s337] sm:$0xff]
          %v456 = vld [vmem:[%s268] sm:$0xff]
          %v457 = vld [vmem:[%s268 + $0x8] sm:$0xff]
          %v458 = vld [vmem:[%s268 + $0x10] sm:$0xff]
          %v459 = vld [vmem:[%s268 + $0x18] sm:$0xff]
          %v460 = vld [vmem:[%s268 + $0x20] sm:$0xff]
          %v461 = vld [vmem:[%s268 + $0x28] sm:$0xff]
          %v462 = vld [vmem:[%s268 + $0x30] sm:$0xff]
          %v463 = vld [vmem:[%s268 + $0x38] sm:$0xff]
          %v464 = vld [vmem:[%s268 + $0x40] sm:$0xff]
          %v465 = vld [vmem:[%s268 + $0x48] sm:$0xff]
          %v466 = vld [vmem:[%s268 + $0x50] sm:$0xff]
          %v467 = vld [vmem:[%s268 + $0x58] sm:$0xff]
          %v468 = vld [vmem:[%s268 + $0x60] sm:$0xff]
          %v469 = vld [vmem:[%s268 + $0x68] sm:$0xff]
          %v470 = vld [vmem:[%s268 + $0x70] sm:$0xff]
          %v471 = vld [vmem:[%s268 + $0x78] sm:$0xff]
          %v472 = vld [vmem:[#allocation2] sm:$0xff]
          %473 = vmatprep.subr.mxu0 0.0
          %474 = vmatpush1.msra.mxu0 %v471
          %475 = vmatprep.subr.mxu0 0.0
          %476 = vmatpush1.msra.mxu0 %v470
          %477 = vmatprep.subr.mxu0 0.0
          %478 = vmatpush1.msra.mxu0 %v469
          %479 = vmatprep.subr.mxu0 0.0
          %480 = vmatpush1.msra.mxu0 %v468
          %481 = vmatprep.subr.mxu0 0.0
          %482 = vmatpush1.msra.mxu0 %v467
          %483 = vmatprep.subr.mxu0 0.0
          %484 = vmatpush1.msra.mxu0 %v466
          %485 = vmatprep.subr.mxu0 0.0
          %486 = vmatpush1.msra.mxu0 %v465
          %487 = vmatprep.subr.mxu0 0.0
          %488 = vmatpush1.msra.mxu0 %v464
          %489 = vmatprep.subr.mxu0 0.0
          %490 = vmatpush1.msra.mxu0 %v463
          %491 = vmatprep.subr.mxu0 0.0
          %492 = vmatpush1.msra.mxu0 %v462
          %493 = vmatprep.subr.mxu0 0.0
          %494 = vmatpush1.msra.mxu0 %v461
          %495 = vmatprep.subr.mxu0 0.0
          %496 = vmatpush1.msra.mxu0 %v460
          %497 = vmatprep.subr.mxu0 0.0
          %498 = vmatpush1.msra.mxu0 %v459
          %499 = vmatprep.subr.mxu0 0.0
          %500 = vmatpush1.msra.mxu0 %v458
          %501 = vmatprep.subr.mxu0 0.0
          %502 = vmatpush1.msra.mxu0 %v457
          %503 = vmatprep.subr.mxu0 0.0
          %504 = vmatpush1.msra.mxu0 %v456
          %505 = vmatprep.subr.mxu0 0.0
          %506 = vmatpush2.msra.mxu0 0.0
          %507 = vmatprep.subr.mxu0 0.0
          %508 = vmatpush2.msra.mxu0 0.0
          %509 = vmatprep.subr.mxu0 0.0
          %510 = vmatpush2.msra.mxu0 0.0
          %511 = vmatprep.subr.mxu0 0.0
          %512 = vmatpush2.msra.mxu0 0.0
          %513 = vmatprep.subr.mxu0 0.0
          %514 = vmatpush2.msra.mxu0 0.0
          %515 = vmatprep.subr.mxu0 0.0
          %516 = vmatpush2.msra.mxu0 0.0
          %517 = vmatprep.subr.mxu0 0.0
          %518 = vmatpush2.msra.mxu0 0.0
          %519 = vmatprep.subr.mxu0 0.0
          %520 = vmatpush2.msra.mxu0 0.0
          %521 = vmatprep.subr.mxu0 0.0
          %522 = vmatpush2.msra.mxu0 0.0
          %523 = vmatprep.subr.mxu0 0.0
          %524 = vmatpush2.msra.mxu0 0.0
          %525 = vmatprep.subr.mxu0 0.0
          %526 = vmatpush2.msra.mxu0 0.0
          %527 = vmatprep.subr.mxu0 0.0
          %528 = vmatpush2.msra.mxu0 0.0
          %529 = vmatprep.subr.mxu0 0.0
          %530 = vmatpush2.msra.mxu0 0.0
          %531 = vmatprep.subr.mxu0 0.0
          %532 = vmatpush2.msra.mxu0 0.0
          %533 = vmatprep.subr.mxu0 0.0
          %534 = vmatpush2.msra.mxu0 0.0
          %535 = vmatprep.subr.mxu0 0.0
          %536 = vmatpush2.msra.mxu0 0.0
          %537 = vmatprep.mubr.f32.mxu0 0.0
          %538 = vmatmul.mubr.f32.gmra.mxu0 %v455
          %v539 = vpop.f32.mrf.mxu0
          %v540 = vadd.f32 0.0, %v539
          %v541 = vpop.f32.mrf.mxu0
          %542 = vdwg.mxu0
          %v543 = vadd.f32 %v472, %v540
          %544 = vst [vmem:[#allocation2] sm:$0xff] %v543
        $region52: #{rnncell_forward.1} parent=35 // pred_fallthru
          _
        %p545 = scmp.eq.s32.totalorder %s25, 1
        // Predicated region
        $region53: #{rnncell_forward.1} parent=35 // pred_check
          %p546 = pneg %p545
        $region54: #{rnncell_forward.1} parent=35 // pred_check_branch
          %548 = sbr.rel (%p546) target = $region56
        $region55: #{rnncell_forward.1} parent=35 // pred_region
          %v549 = vld [vmem:[#allocation2] sm:$0xff]
          %v550 = vld [vmem:[%s344] sm:$0x1]
          %v552 = vlaneseq
          %v553 = vshrl.u32 %v552, 7
          %v554 = vsub.s32 0, %v553
          %v555 = vrot.slane %v550, %v554
          %v557 = vadd.f32 %v549, %v555
          %v558 = vtanh.pop %v557
          %559 = vst [vmem:[%s351] sm:$0xff] %v558
        $region56: #{rnncell_forward.1} parent=35 // pred_fallthru
          _
        %p560 = scmp.lt.s32.totalorder %s23, 0
        %s561 = scalar_select %p560, %s23, 0
        %p562 = scmp.lt.s32.totalorder %s24, 0
        %s563 = scalar_select %p562, %s24, 0
        %s564 = sadd.s32 %s563, %s561
        %s565 = smul.addr %s564, 8
        %s566 = scalar_lea.vmem %s4, %s565
        // Predicated region
        $region57: #{rnncell_forward.1} parent=35 // pred_check
          %p567 = pneg %p177
        $region58: #{rnncell_forward.1} parent=35 // pred_check_branch
          %569 = sbr.rel (%p567) target = $region60
        $region59: #{rnncell_forward.1} parent=35 // pred_region
          _
        $region60: #{rnncell_forward.1} parent=35 // pred_fallthru
          _
        // Predicated region
        $region61: #{rnncell_forward.1} parent=35 // pred_check
          %p570 = pneg %p177
        $region62: #{rnncell_forward.1} parent=35 // pred_check_branch
          %572 = sbr.rel (%p570) target = $region64
        $region63: #{rnncell_forward.1} parent=35 // pred_region
          %p573 = scmp.lt.s32.totalorder %s23, 0
          %s574 = scalar_select %p573, %s23, 0
          %p575 = scmp.lt.s32.totalorder %s24, 0
          %s576 = scalar_select %p575, %s24, 0
          %s577 = sadd.s32 %s576, %s574
          %s578 = smul.addr %s577, 8
          %s579 = scalar_lea.vmem %s4, %s578
        $region64: #{rnncell_forward.1} parent=35 // pred_fallthru
          _
      $region36: #{rnncell_forward.1} parent=5 // pred_fallthru
        _
      %p580 = scmp.le.s32.totalorder 2, %s13
      // Predicated region
      $region65: #{rnncell_forward.1} parent=5 // pred_check
        %p581 = pneg %p580
      $region66: #{rnncell_forward.1} parent=5 // pred_check_branch
        %583 = sbr.rel (%p581) target = $region68
      $region67: #{rnncell_forward.1} parent=5 // pred_region
        %s584 = ssub.s32 %s13, 2
      $region68: #{rnncell_forward.1} parent=5 // pred_fallthru
        _
    $region6: #{rnncell_forward.1} parent=1 // loop_footer
      %s17 = sadd.s32 1, %s13
    $region7: #{rnncell_forward.1} parent=1 // loop_footer_branch
      %12 = sbr.rel target = $region3
    $region8: #{rnncell_forward.1} parent=1 // loop_exit
      _
    %585 = vsyncpa [#allocation4], 1
    %s586 = scalar_lea.sflag [#allocation4], 1
    %587 = vsyncpa %s586, 1

</llo_original>
